<compile_context>
chip_gen: v5e
topology: v5e:2x2
jax: 0.10.0
libtpu: 0.0.40
codegen_flags: <defaults>
</compile_context>

<pallas_src>
import math
import functools

import jax
import jax.numpy as jnp
from jax.experimental import pallas as pl
from jax.experimental.pallas import tpu as pltpu


def _build_pe(max_len: int, d_model: int, dtype=jnp.float32) -> jnp.ndarray:
    """Sinusoidal positional-encoding table, shape (max_len, d_model).

    Equivalent to the torch buffer (max_len, 1, d_model) with the middle axis
    squeezed; the batch broadcast happens inside the kernel.
    """
    assert d_model % 2 == 0, "PositionalEncoding requires an even d_model"
    position = jnp.arange(0, max_len, dtype=jnp.float32)[:, None]            # (max_len, 1)
    div_term = jnp.exp(
        jnp.arange(0, d_model, 2, dtype=jnp.float32) * (-math.log(10000.0) / d_model)
    )                                                                         # (d_model/2,)
    angles = position * div_term                                              # (max_len, d_model/2)
    pe = jnp.zeros((max_len, d_model), dtype=jnp.float32)
    pe = pe.at[:, 0::2].set(jnp.sin(angles))
    pe = pe.at[:, 1::2].set(jnp.cos(angles))
    return pe.astype(dtype)


def _pe_add_kernel(x_ref, pe_ref, o_ref, *, batch: int, d_model: int):
    # x_ref / o_ref: (seq_tile, B*D) lane-dense tiles.  pe_ref: (seq_tile, D).
    # Add pe to each batch chunk at a static lane offset (implicit batch
    # broadcast, no materialized broadcast/concat temp).  Compute in f32:
    # exact for f32 I/O, and keeps v5e (f32-only VPU) correct for bf16 I/O.
    pe_t = pe_ref[...].astype(jnp.float32)
    for b in range(batch):
        lo = b * d_model
        xb = x_ref[:, lo:lo + d_model].astype(jnp.float32)
        o_ref[:, lo:lo + d_model] = (xb + pe_t).astype(o_ref.dtype)


def _pick_seq_tile(seq_len: int, row_bytes_x: int, row_bytes_pe: int) -> int:
    # Double-buffered x + out + pe per sequence row.
    per_row = 4 * row_bytes_x + 2 * row_bytes_pe
    budget = 12 * 1024 * 1024  # conservative across v5e / v6e / v7x VMEM limits
    rows = max(8, budget // max(per_row, 1))
    if rows >= seq_len:
        return seq_len
    return max(8, (int(rows) // 8) * 8)  # keep the sublane (second-minor) dim 8-aligned


@functools.partial(jax.jit, static_argnames=("seq_tile",))
def positional_encoding_fwd(x: jnp.ndarray, pe: jnp.ndarray, *, seq_tile=None):
    """x: (S, B, D).  pe: (max_len, D) sinusoidal table.  Returns x + pe[:S]."""
    S, B, D = x.shape
    assert pe.shape[-1] == D and pe.shape[0] >= S

    itemsize = jnp.dtype(x.dtype).itemsize
    if seq_tile is None:
        seq_tile = _pick_seq_tile(S, B * D * itemsize, D * itemsize)
    seq_tile = min(int(seq_tile), S)

    x2 = x.reshape(S, B * D)          # free reshape: merge trailing dims (lane-dense view)
    pe2 = pe.astype(x.dtype)          # no-op when dtypes already match

    grid = (pl.cdiv(S, seq_tile),)
    vmem_need = 2 * seq_tile * (2 * B * D + D) * itemsize  # double-buffered x + out + pe
    vmem_limit = int(min(48 * 1024 * 1024, max(16 * 1024 * 1024, 2 * vmem_need)))

    out2 = pl.pallas_call(
        functools.partial(_pe_add_kernel, batch=B, d_model=D),
        out_shape=jax.ShapeDtypeStruct((S, B * D), x.dtype),
        grid_spec=pltpu.PrefetchScalarGridSpec(
            num_scalar_prefetch=0,
            grid=grid,
            in_specs=[
                pl.BlockSpec((seq_tile, B * D), lambda i: (i, 0)),
                # Full (max_len, D) table passed in; only the first
                # ceil(S/seq_tile) blocks are ever DMA'd by this index_map.
                pl.BlockSpec((seq_tile, D), lambda i: (i, 0)),
            ],
            out_specs=pl.BlockSpec((seq_tile, B * D), lambda i: (i, 0)),
        ),
        compiler_params=pltpu.CompilerParams(
            dimension_semantics=("parallel",),
            vmem_limit_bytes=vmem_limit,
        ),
    )(x2, pe2)
    # TODO(synk): training-mode nn.Dropout uses torch RNG (not reproducible here); eval-mode
    #             dropout is the identity.  A fused training path would draw the mask in-kernel
    #             via pltpu.prng_seed / pltpu.prng_random_bits to avoid a second HBM pass.
    return out2.reshape(S, B, D)


if __name__ == "__main__":
    # Small shapes consistent with the module's forward: (seq, batch, d_model).
    S, B, D = 8, 2, 32
    max_len = 5000
    dropout_p = 0.1  # unused in eval mode

    key = jax.random.PRNGKey(0)
    x = jax.random.normal(key, (S, B, D), dtype=jnp.float32)

    pe = _build_pe(max_len, D)

    out = positional_encoding_fwd(x, pe)
    out = jax.block_until_ready(out)

    # Reference check in plain JAX (eval-mode dropout == identity).
    ref = x + pe[:S][:, None, :]
    assert out.shape == (S, B, D)
    assert jnp.allclose(out, ref, atol=1e-6), "mismatch vs reference"

    print("KERNEL_OK")
</pallas_src>

<mosaic_0001>
module attributes {stable_mosaic.version = 11 : i64} {
  func.func @_pe_add_kernel(%arg0: i32, %arg1: memref<8x64xf32, #tpu.memory_space<vmem>>, %arg2: memref<8x32xf32, #tpu.memory_space<vmem>>, %arg3: memref<8x64xf32, #tpu.memory_space<vmem>>) attributes {dimension_semantics = [#tpu.dimension_semantics<parallel>], iteration_bounds = array<i64: 1>, scalar_prefetch = 0 : i64, scratch_operands = 0 : i64, tpu.core_type = #tpu.core_type<tc>, window_params = [{transform_indices = @transform_0, window_bounds = array<i64: 8, 64>}, {transform_indices = @transform_1, window_bounds = array<i64: 8, 32>}, {transform_indices = @transform_2, window_bounds = array<i64: 8, 64>}]} {
    %c0 = arith.constant 0 : index
    %c0_0 = arith.constant 0 : index
    %0 = vector.load %arg2[%c0, %c0_0] : memref<8x32xf32, #tpu.memory_space<vmem>>, vector<8x32xf32>
    %c0_1 = arith.constant 0 : index
    %c0_2 = arith.constant 0 : index
    %1 = vector.load %arg1[%c0_1, %c0_2] : memref<8x64xf32, #tpu.memory_space<vmem>>, vector<8x32xf32>
    %2 = arith.addf %1, %0 : vector<8x32xf32>
    %c0_3 = arith.constant 0 : index
    %c0_4 = arith.constant 0 : index
    %3 = vector.load %arg3[%c0_3, %c0_4] : memref<8x64xf32, #tpu.memory_space<vmem>>, vector<8x32xf32>
    tpu.vector_store %arg3[%c0_3, %c0_4], %2 {strides = array<i32>} : memref<8x64xf32, #tpu.memory_space<vmem>>, vector<8x32xf32>,
    %c0_5 = arith.constant 0 : index
    %c32 = arith.constant 32 : index
    %4 = vector.load %arg1[%c0_5, %c32] : memref<8x64xf32, #tpu.memory_space<vmem>>, vector<8x32xf32>
    %5 = arith.addf %4, %0 : vector<8x32xf32>
    %c0_6 = arith.constant 0 : index
    %c32_7 = arith.constant 32 : index
    %6 = vector.load %arg3[%c0_6, %c32_7] : memref<8x64xf32, #tpu.memory_space<vmem>>, vector<8x32xf32>
    tpu.vector_store %arg3[%c0_6, %c32_7], %5 {strides = array<i32>} : memref<8x64xf32, #tpu.memory_space<vmem>>, vector<8x32xf32>,
    return
  }
  func.func @transform_0(%arg0: i32) -> (i32, i32) {
    %c0_i32 = arith.constant 0 : i32
    %c0_i32_0 = arith.constant 0 : i32
    return %arg0, %c0_i32 : i32, i32
  }
  func.func @transform_1(%arg0: i32) -> (i32, i32) {
    %c0_i32 = arith.constant 0 : i32
    %c0_i32_0 = arith.constant 0 : i32
    return %arg0, %c0_i32 : i32, i32
  }
  func.func @transform_2(%arg0: i32) -> (i32, i32) {
    %c0_i32 = arith.constant 0 : i32
    %c0_i32_0 = arith.constant 0 : i32
    return %arg0, %c0_i32 : i32, i32
  }
}

</mosaic_0001>

<llo_original>
// kernel: positional_encoding_fwd.1
$region0: #{positional_encoding_fwd.1}
  #allocation0 [shape = 'u32[]', space=smem, size = 0x4, offset = 0x4, fixed_abs, tag = 'smem constant byte address 0x4 - core index']
  #allocation1 [shape = 'u32[72,128]{1,0:T(1,128)}', space=vmem, size = 0x9000, scoped, tag = 'internal scratch']
  %s0 = inlined_call_operand.vmem [shape: f32[8,64], index: 0, kind: input, shape index: {}]
  %s1 = inlined_call_operand.vmem [shape: f32[5000,32], index: 1, kind: input, shape index: {}]
  %s2 = inlined_call_operand.vmem [shape: f32[8,64], index: 2, kind: output, shape index: {}]
  %s3 = sld [smem:[#allocation0]]
  $region18: #{positional_encoding_fwd.1} parent=0
    _
  %s5 = ssub.s32 1, %s3
  %s6 = scalar_select 0, %s5, %s3
  // Predicated region
  $region2: #{positional_encoding_fwd.1} parent=0 // pred_check
    _
  $region3: #{positional_encoding_fwd.1} parent=0 // pred_check_branch
    %8 = sbr.rel (0) target = $region5
  $region4: #{positional_encoding_fwd.1} parent=0 // pred_region
    _
  $region5: #{positional_encoding_fwd.1} parent=0 // pred_fallthru
    _
  // Predicated region
  $region6: #{positional_encoding_fwd.1} parent=0 // pred_check
    _
  $region7: #{positional_encoding_fwd.1} parent=0 // pred_check_branch
    %10 = sbr.rel (0) target = $region9
  $region8: #{positional_encoding_fwd.1} parent=0 // pred_region
    _
  $region9: #{positional_encoding_fwd.1} parent=0 // pred_fallthru
    _
  %v11 = vld [vmem:[%s1] sm:$0xff]
  %v12 = vld [vmem:[%s0] sm:$0xff]
  %v13 = vadd.f32 %v12, %v11
  %vm14 = vcmask 261120
  %15 = vst.msk [vmem:[%s2] sm:$0xff] %vm14, %v13
  %v16 = vld [vmem:[%s0] sm:$0xff]
  %18 = vrot.lane.b32.xlu0 %v11, 32
  %v19 = vpop.permute.xlu0 %18
  %v21 = vadd.f32 %v16, %v19
  %vm22 = vcmask 523520
  %23 = vst.msk [vmem:[%s2] sm:$0xff] %vm22, %v21
  // Predicated region
  $region10: #{positional_encoding_fwd.1} parent=0 // pred_check
    _
  $region11: #{positional_encoding_fwd.1} parent=0 // pred_check_branch
    %25 = sbr.rel (0) target = $region13
  $region12: #{positional_encoding_fwd.1} parent=0 // pred_region
    _
  $region13: #{positional_encoding_fwd.1} parent=0 // pred_fallthru
    _
  // Predicated region
  $region14: #{positional_encoding_fwd.1} parent=0 // pred_check
    _
  $region15: #{positional_encoding_fwd.1} parent=0 // pred_check_branch
    %27 = sbr.rel (0) target = $region17
  $region16: #{positional_encoding_fwd.1} parent=0 // pred_region
    _
  $region17: #{positional_encoding_fwd.1} parent=0 // pred_fallthru
    _

</llo_original>
